<compile_context>
chip_gen: v7x
topology: tpu7x:2x2x1
jax: 0.10.0
libtpu: 0.0.40
codegen_flags: <defaults>
</compile_context>

<pallas_src>
import functools

import jax
import jax.numpy as jnp
from jax import lax
from jax.experimental import pallas as pl
from jax.experimental.pallas import tpu as pltpu


def _stats_kernel(x_ref, w_ref, s_ref, q_ref):
    """Per row-tile: masked relu + fused block-diagonal 1x1-conv matmul (kept in
    VMEM only) + per-tile BN partial statistics written to this tile's own stat
    block (no cross-tile accumulation -> megacore-safe)."""
    x = x_ref[...]                                   # (TM, 2*Cin)
    cin = w_ref.shape[0] // 2                        # static
    col = lax.broadcasted_iota(jnp.int32, x.shape, 1)
    # relu applies only to branch-1 channels (first Cin columns of [x1 | x2]).
    x = jnp.where(col < cin, jnp.maximum(x, 0.0), x)
    y = jnp.dot(x, w_ref[...], preferred_element_type=jnp.float32)  # (TM, Cout)
    s = jnp.sum(y, axis=0, keepdims=True)            # (1, Cout)
    q = jnp.sum(y * y, axis=0, keepdims=True)        # (1, Cout)
    # Stat blocks are (8, Cout) to satisfy the (8, 128) tiling rule; replicate the
    # per-tile sums across the 8 sublane rows, row 0 is read back on the host side.
    s_ref[...] = jnp.broadcast_to(s, s_ref.shape)
    q_ref[...] = jnp.broadcast_to(q, q_ref.shape)


def _apply_kernel(x_ref, w_ref, b_ref, o_ref):
    """Per row-tile: masked relu + matmul with BN-scale-folded weight + bias.
    Produces the final normalized output in one lane-dense store."""
    x = x_ref[...]                                   # (TM, 2*Cin)
    cin = w_ref.shape[0] // 2
    col = lax.broadcasted_iota(jnp.int32, x.shape, 1)
    x = jnp.where(col < cin, jnp.maximum(x, 0.0), x)
    o_ref[...] = (jnp.dot(x, w_ref[...], preferred_element_type=jnp.float32)
                  + b_ref[...])


@functools.partial(jax.jit, static_argnames=("stride",))
def skip_connection_forward(x, w1, w2, gamma, beta, *, stride, eps=1e-5):
    # x: (N, Cin, H, W) float32 (NCHW, like PyTorch)
    # w1: (Cin, C1), w2: (Cin, C2)  -- 1x1 conv weights, channels-last for matmul
    N, Cin, H, W = x.shape
    C1 = w1.shape[1]
    C2 = w2.shape[1]
    Cout = C1 + C2

    # --- glue: single NCHW -> NHWC transpose, both branches via strided slices ---
    xh = x.transpose(0, 2, 3, 1)                     # (N, H, W, Cin)
    # AvgPool2d(kernel=1, stride=s) == strided subsample.
    x1h = xh[:, ::stride, ::stride, :]               # branch 1 (relu in kernel)
    Ho, Wo = x1h.shape[1], x1h.shape[2]
    # branch 2: F.pad(x[:, :, 1:, 1:], (0,1,0,1)) then subsample == slice starting
    # at (1, 1) with the same stride; only the trailing row/col (if any) is the
    # zero-padded region.
    x2h = xh[:, 1::stride, 1::stride, :]
    pad_h, pad_w = Ho - x2h.shape[1], Wo - x2h.shape[2]
    if pad_h or pad_w:                               # static decision (<= 1 row/col)
        x2h = jnp.pad(x2h, ((0, 0), (0, pad_h), (0, pad_w), (0, 0)))

    P = N * Ho * Wo
    # rows of [x1 | x2]: (P, 2*Cin).  XLA fuses slice+concat+reshape into one pass;
    # both pallas_calls below consume this same buffer.
    rcat = jnp.concatenate([x1h, x2h], axis=-1).reshape(P, 2 * Cin)

    # Adaptive row-tile: target ~4 MiB of input rows per grid step (per-step
    # overhead ~0.35us dominates tiny tiles at narrow channel widths), multiple of
    # 8 sublanes, capped by the padded row count so small problems use one step.
    row_bytes = (2 * Cin + Cout) * 4
    tm = max(512, min(32768, (4 * 1024 * 1024) // max(row_bytes, 1)))
    tm = max(8, (tm // 8) * 8)
    tm = min(tm, pl.cdiv(P, 8) * 8)

    P_pad = pl.cdiv(P, tm) * tm
    if P_pad != P:  # zero rows contribute 0 to matmul and stats -> harmless
        rcat = jnp.pad(rcat, ((0, P_pad - P), (0, 0)))
    num_tiles = P_pad // tm
    grid = (num_tiles,)

    # block-diagonal fused weight: [[w1, 0], [0, w2]]  (2*Cin, Cout)
    wcat = jnp.zeros((2 * Cin, Cout), jnp.float32)
    wcat = wcat.at[:Cin, :C1].set(w1).at[Cin:, C1:].set(w2)

    row_in_spec = pl.BlockSpec((tm, 2 * Cin), lambda i: (i, 0))
    w_spec = pl.BlockSpec((2 * Cin, Cout), lambda i: (0, 0))
    row_out_spec = pl.BlockSpec((tm, Cout), lambda i: (i, 0))
    stat_spec = pl.BlockSpec((8, Cout), lambda i: (i, 0))
    chan_spec = pl.BlockSpec((1, Cout), lambda i: (0, 0))

    # --- pass 1: per-tile BN partial statistics only (y never leaves VMEM) ---
    s_part, q_part = pl.pallas_call(
        _stats_kernel,
        out_shape=(
            jax.ShapeDtypeStruct((num_tiles * 8, Cout), jnp.float32),  # partial sum
            jax.ShapeDtypeStruct((num_tiles * 8, Cout), jnp.float32),  # partial sumsq
        ),
        grid=grid,
        in_specs=[row_in_spec, w_spec],
        out_specs=(stat_spec, stat_spec),
        compiler_params=pltpu.CompilerParams(
            dimension_semantics=("parallel",)),
    )(rcat, wcat)

    # tiny (num_tiles, Cout) partial reduction + BN param folding = glue
    ssum = s_part[::8].sum(axis=0)                   # (Cout,)
    ssq = q_part[::8].sum(axis=0)                    # (Cout,)
    mean = ssum / P                                  # biased batch stats (train mode)
    var = jnp.maximum(ssq / P - mean * mean, 0.0)
    invstd = lax.rsqrt(var + eps)
    scale = gamma * invstd                           # (Cout,)
    bias = (beta - mean * scale).reshape(1, Cout)
    wscaled = wcat * scale[None, :]                  # fold BN scale into the weight

    # --- pass 2: recompute matmul with folded weight, stream final output ---
    o = pl.pallas_call(
        _apply_kernel,
        out_shape=jax.ShapeDtypeStruct((P_pad, Cout), jnp.float32),
        grid=grid,
        in_specs=[row_in_spec, w_spec, chan_spec],
        out_specs=row_out_spec,
        compiler_params=pltpu.CompilerParams(
            dimension_semantics=("parallel",)),
    )(rcat, wscaled, bias)

    # back to NCHW
    return o[:P].reshape(N, Ho, Wo, Cout).transpose(0, 3, 1, 2)


def _reference(x, w1, w2, gamma, beta, stride, eps=1e-5):
    """Pure-JAX reference of the PyTorch forward (training-mode BN)."""
    x1 = jnp.maximum(x, 0.0)[:, :, ::stride, ::stride]
    xs = jnp.pad(x[:, :, 1:, 1:], ((0, 0), (0, 0), (0, 1), (0, 1)))
    x2 = xs[:, :, ::stride, ::stride]
    o1 = jnp.einsum("nchw,cd->ndhw", x1, w1)
    o2 = jnp.einsum("nchw,cd->ndhw", x2, w2)
    o = jnp.concatenate([o1, o2], axis=1)
    m = o.mean(axis=(0, 2, 3), keepdims=True)
    v = ((o - m) ** 2).mean(axis=(0, 2, 3), keepdims=True)
    return (o - m) / jnp.sqrt(v + eps) * gamma[None, :, None, None] \
        + beta[None, :, None, None]


if __name__ == "__main__":
    # SkipConnection(in_channels=4, out_channels=7, stride=2)
    N, Cin, H, W = 2, 4, 16, 16
    Cout, stride = 7, 2
    C1 = Cout // 2                      # Skip_1_Conv out channels
    C2 = Cout - C1                      # Skip_2_Conv out channels (odd-Cout branch)

    key = jax.random.PRNGKey(0)
    kx, k1, k2 = jax.random.split(key, 3)
    x = jax.random.normal(kx, (N, Cin, H, W), jnp.float32)
    # deterministic synthetic 1x1-conv weights, stored as (Cin, Cout_half) for matmul
    w1 = jax.random.normal(k1, (Cin, C1), jnp.float32) * 0.3
    w2 = jax.random.normal(k2, (Cin, C2), jnp.float32) * 0.3
    gamma = jnp.ones((Cout,), jnp.float32)   # BatchNorm2d default weight
    beta = jnp.zeros((Cout,), jnp.float32)   # BatchNorm2d default bias

    out = skip_connection_forward(x, w1, w2, gamma, beta, stride=stride)
    out = jax.block_until_ready(out)

    ref = _reference(x, w1, w2, gamma, beta, stride)
    assert out.shape == (N, Cout, H // stride, W // stride), out.shape
    assert jnp.allclose(out, ref, atol=1e-4, rtol=1e-4), \
        float(jnp.max(jnp.abs(out - ref)))

    print("KERNEL_OK")
</pallas_src>

<mosaic_0001>
module attributes {stable_mosaic.version = 11 : i64} {
  func.func @_stats_kernel(%arg0: i32, %arg1: memref<128x8xf32, #tpu.memory_space<vmem>>, %arg2: memref<8x7xf32, #tpu.memory_space<vmem>>, %arg3: memref<8x7xf32, #tpu.memory_space<vmem>>, %arg4: memref<8x7xf32, #tpu.memory_space<vmem>>) attributes {dimension_semantics = [#tpu.dimension_semantics<parallel>], iteration_bounds = array<i64: 1>, scalar_prefetch = 0 : i64, scratch_operands = 0 : i64, tpu.core_type = #tpu.core_type<tc>, window_params = [{transform_indices = @transform_0, window_bounds = array<i64: 128, 8>}, {pipeline_mode = #tpu.pipeline_mode<synchronous>, transform_indices = @transform_1, window_bounds = array<i64: 8, 7>}, {transform_indices = @transform_2, window_bounds = array<i64: 8, 7>}, {transform_indices = @transform_3, window_bounds = array<i64: 8, 7>}]} {
    %c0 = arith.constant 0 : index
    %c0_0 = arith.constant 0 : index
    %0 = vector.load %arg1[%c0, %c0_0] : memref<128x8xf32, #tpu.memory_space<vmem>>, vector<128x8xf32>
    %1 = tpu.iota {dimensions = array<i32: 1>} : vector<128x8xi32>
    %c4_i32 = arith.constant 4 : i32
    %2 = vector.broadcast %c4_i32 : i32 to vector<128x8xi32>
    %3 = arith.cmpi slt, %1, %2 : vector<128x8xi32>
    %cst = arith.constant 0.000000e+00 : f32
    %4 = vector.broadcast %cst : f32 to vector<128x8xf32>
    %5 = arith.maximumf %0, %4 : vector<128x8xf32>
    %6 = arith.select %3, %5, %0 : vector<128x8xi1>, vector<128x8xf32>
    %c0_1 = arith.constant 0 : index
    %c0_2 = arith.constant 0 : index
    %7 = vector.load %arg2[%c0_1, %c0_2] : memref<8x7xf32, #tpu.memory_space<vmem>>, vector<8x7xf32>
    %cst_3 = arith.constant dense<0.000000e+00> : vector<128x7xf32>
    %8 = tpu.matmul %6, %7, %cst_3 {dimension_numbers = #tpu.dot_dimension_numbers<[1], [0], [0], [1], [0, 0, 1, 1], [], []>} : vector<128x8xf32>, vector<8x7xf32>, vector<128x7xf32> -> vector<128x7xf32>
    %cst_4 = arith.constant dense<0.000000e+00> : vector<7xf32>
    %9 = vector.multi_reduction <add>, %8, %cst_4 [0] : vector<128x7xf32> to vector<7xf32>
    %10 = vector.shape_cast %9 : vector<7xf32> to vector<1x7xf32>
    %11 = arith.mulf %8, %8 : vector<128x7xf32>
    %cst_5 = arith.constant dense<0.000000e+00> : vector<7xf32>
    %12 = vector.multi_reduction <add>, %11, %cst_5 [0] : vector<128x7xf32> to vector<7xf32>
    %13 = vector.shape_cast %12 : vector<7xf32> to vector<1x7xf32>
    %14 = vector.shape_cast %10 : vector<1x7xf32> to vector<1x7xf32>
    %15 = vector.broadcast %14 : vector<1x7xf32> to vector<8x7xf32>
    %c0_6 = arith.constant 0 : index
    %c0_7 = arith.constant 0 : index
    %16 = vector.load %arg3[%c0_6, %c0_7] : memref<8x7xf32, #tpu.memory_space<vmem>>, vector<8x7xf32>
    tpu.vector_store %arg3[%c0_6, %c0_7], %15 {strides = array<i32>} : memref<8x7xf32, #tpu.memory_space<vmem>>, vector<8x7xf32>,
    %17 = vector.shape_cast %13 : vector<1x7xf32> to vector<1x7xf32>
    %18 = vector.broadcast %17 : vector<1x7xf32> to vector<8x7xf32>
    %c0_8 = arith.constant 0 : index
    %c0_9 = arith.constant 0 : index
    %19 = vector.load %arg4[%c0_8, %c0_9] : memref<8x7xf32, #tpu.memory_space<vmem>>, vector<8x7xf32>
    tpu.vector_store %arg4[%c0_8, %c0_9], %18 {strides = array<i32>} : memref<8x7xf32, #tpu.memory_space<vmem>>, vector<8x7xf32>,
    return
  }
  func.func @transform_0(%arg0: i32) -> (i32, i32) {
    %c0_i32 = arith.constant 0 : i32
    %c0_i32_0 = arith.constant 0 : i32
    return %arg0, %c0_i32 : i32, i32
  }
  func.func @transform_1(%arg0: i32) -> (i32, i32) {
    %c0_i32 = arith.constant 0 : i32
    %c0_i32_0 = arith.constant 0 : i32
    %c0_i32_1 = arith.constant 0 : i32
    return %c0_i32, %c0_i32_0 : i32, i32
  }
  func.func @transform_2(%arg0: i32) -> (i32, i32) {
    %c0_i32 = arith.constant 0 : i32
    %c0_i32_0 = arith.constant 0 : i32
    return %arg0, %c0_i32 : i32, i32
  }
  func.func @transform_3(%arg0: i32) -> (i32, i32) {
    %c0_i32 = arith.constant 0 : i32
    %c0_i32_0 = arith.constant 0 : i32
    return %arg0, %c0_i32 : i32, i32
  }
}

module attributes {stable_mosaic.version = 11 : i64} {
  func.func @_apply_kernel(%arg0: i32, %arg1: memref<128x8xf32, #tpu.memory_space<vmem>>, %arg2: memref<8x7xf32, #tpu.memory_space<vmem>>, %arg3: memref<1x7xf32, #tpu.memory_space<vmem>>, %arg4: memref<128x7xf32, #tpu.memory_space<vmem>>) attributes {dimension_semantics = [#tpu.dimension_semantics<parallel>], iteration_bounds = array<i64: 1>, scalar_prefetch = 0 : i64, scratch_operands = 0 : i64, tpu.core_type = #tpu.core_type<tc>, window_params = [{transform_indices = @transform_0, window_bounds = array<i64: 128, 8>}, {pipeline_mode = #tpu.pipeline_mode<synchronous>, transform_indices = @transform_1, window_bounds = array<i64: 8, 7>}, {pipeline_mode = #tpu.pipeline_mode<synchronous>, transform_indices = @transform_2, window_bounds = array<i64: 1, 7>}, {transform_indices = @transform_3, window_bounds = array<i64: 128, 7>}]} {
    %c0 = arith.constant 0 : index
    %c0_0 = arith.constant 0 : index
    %0 = vector.load %arg1[%c0, %c0_0] : memref<128x8xf32, #tpu.memory_space<vmem>>, vector<128x8xf32>
    %1 = tpu.iota {dimensions = array<i32: 1>} : vector<128x8xi32>
    %c4_i32 = arith.constant 4 : i32
    %2 = vector.broadcast %c4_i32 : i32 to vector<128x8xi32>
    %3 = arith.cmpi slt, %1, %2 : vector<128x8xi32>
    %cst = arith.constant 0.000000e+00 : f32
    %4 = vector.broadcast %cst : f32 to vector<128x8xf32>
    %5 = arith.maximumf %0, %4 : vector<128x8xf32>
    %6 = arith.select %3, %5, %0 : vector<128x8xi1>, vector<128x8xf32>
    %c0_1 = arith.constant 0 : index
    %c0_2 = arith.constant 0 : index
    %7 = vector.load %arg2[%c0_1, %c0_2] : memref<8x7xf32, #tpu.memory_space<vmem>>, vector<8x7xf32>
    %cst_3 = arith.constant dense<0.000000e+00> : vector<128x7xf32>
    %8 = tpu.matmul %6, %7, %cst_3 {dimension_numbers = #tpu.dot_dimension_numbers<[1], [0], [0], [1], [0, 0, 1, 1], [], []>} : vector<128x8xf32>, vector<8x7xf32>, vector<128x7xf32> -> vector<128x7xf32>
    %c0_4 = arith.constant 0 : index
    %c0_5 = arith.constant 0 : index
    %9 = vector.load %arg3[%c0_4, %c0_5] : memref<1x7xf32, #tpu.memory_space<vmem>>, vector<1x7xf32>
    %10 = vector.broadcast %9 : vector<1x7xf32> to vector<128x7xf32>
    %11 = arith.addf %8, %10 : vector<128x7xf32>
    %c0_6 = arith.constant 0 : index
    %c0_7 = arith.constant 0 : index
    %12 = vector.load %arg4[%c0_6, %c0_7] : memref<128x7xf32, #tpu.memory_space<vmem>>, vector<128x7xf32>
    tpu.vector_store %arg4[%c0_6, %c0_7], %11 {strides = array<i32>} : memref<128x7xf32, #tpu.memory_space<vmem>>, vector<128x7xf32>,
    return
  }
  func.func @transform_0(%arg0: i32) -> (i32, i32) {
    %c0_i32 = arith.constant 0 : i32
    %c0_i32_0 = arith.constant 0 : i32
    return %arg0, %c0_i32 : i32, i32
  }
  func.func @transform_1(%arg0: i32) -> (i32, i32) {
    %c0_i32 = arith.constant 0 : i32
    %c0_i32_0 = arith.constant 0 : i32
    %c0_i32_1 = arith.constant 0 : i32
    return %c0_i32, %c0_i32_0 : i32, i32
  }
  func.func @transform_2(%arg0: i32) -> (i32, i32) {
    %c0_i32 = arith.constant 0 : i32
    %c0_i32_0 = arith.constant 0 : i32
    %c0_i32_1 = arith.constant 0 : i32
    return %c0_i32, %c0_i32_0 : i32, i32
  }
  func.func @transform_3(%arg0: i32) -> (i32, i32) {
    %c0_i32 = arith.constant 0 : i32
    %c0_i32_0 = arith.constant 0 : i32
    return %arg0, %c0_i32 : i32, i32
  }
}

</mosaic_0001>

<llo_original>
// kernel: skip_connection_forward.3
$region0: #{skip_connection_forward.3}
  #allocation0 [shape = 'u32[]', space=smem, size = 0x4, offset = 0x4, fixed_abs, tag = 'smem constant byte address 0x4 - core index']
  #allocation1 [shape = 'u32[144,128]{1,0:T(1,128)}', space=vmem, size = 0x12000, scoped, tag = 'internal scratch']
  %s0 = inlined_call_operand.vmem [shape: f32[128,8], index: 0, kind: input, shape index: {}]
  %s1 = inlined_call_operand.vmem [shape: f32[8,7], index: 1, kind: input, shape index: {}]
  %s2 = inlined_call_operand.vmem [shape: f32[1,7], index: 2, kind: input, shape index: {}]
  %s3 = inlined_call_operand.vmem [shape: f32[128,7], index: 3, kind: output, shape index: {}]
  %s4 = sld [smem:[#allocation0]]
  $region22: #{skip_connection_forward.3} parent=0
    _
  %s6 = ssub.s32 1, %s4
  %s7 = scalar_select 0, %s6, %s4
  // Predicated region
  $region2: #{skip_connection_forward.3} parent=0 // pred_check
    _
  $region3: #{skip_connection_forward.3} parent=0 // pred_check_branch
    %9 = sbr.rel (0) target = $region5
  $region4: #{skip_connection_forward.3} parent=0 // pred_region
    _
  $region5: #{skip_connection_forward.3} parent=0 // pred_fallthru
    _
  // Predicated region
  $region6: #{skip_connection_forward.3} parent=0 // pred_check
    _
  $region7: #{skip_connection_forward.3} parent=0 // pred_check_branch
    %11 = sbr.rel (0) target = $region9
  $region8: #{skip_connection_forward.3} parent=0 // pred_region
    _
  $region9: #{skip_connection_forward.3} parent=0 // pred_fallthru
    _
  // Predicated region
  $region10: #{skip_connection_forward.3} parent=0 // pred_check
    _
  $region11: #{skip_connection_forward.3} parent=0 // pred_check_branch
    %13 = sbr.rel (0) target = $region13
  $region12: #{skip_connection_forward.3} parent=0 // pred_region
    _
  $region13: #{skip_connection_forward.3} parent=0 // pred_fallthru
    _
  %v14 = vld [vmem:[%s0] sm:$0xff]
  %v15 = vld [vmem:[%s0 + $0x8] sm:$0xff]
  %v16 = vld [vmem:[%s0 + $0x10] sm:$0xff]
  %v17 = vld [vmem:[%s0 + $0x18] sm:$0xff]
  %v18 = vld [vmem:[%s0 + $0x20] sm:$0xff]
  %v19 = vld [vmem:[%s0 + $0x28] sm:$0xff]
  %v20 = vld [vmem:[%s0 + $0x30] sm:$0xff]
  %v21 = vld [vmem:[%s0 + $0x38] sm:$0xff]
  %v22 = vld [vmem:[%s0 + $0x40] sm:$0xff]
  %v23 = vld [vmem:[%s0 + $0x48] sm:$0xff]
  %v24 = vld [vmem:[%s0 + $0x50] sm:$0xff]
  %v25 = vld [vmem:[%s0 + $0x58] sm:$0xff]
  %v26 = vld [vmem:[%s0 + $0x60] sm:$0xff]
  %v27 = vld [vmem:[%s0 + $0x68] sm:$0xff]
  %v28 = vld [vmem:[%s0 + $0x70] sm:$0xff]
  %v29 = vld [vmem:[%s0 + $0x78] sm:$0xff]
  %v30 = vlaneseq
  %v31 = vand.u32 %v30, 127
  %vm32 = vcmp.lt.s32.totalorder %v31, 4
  %v33 = vmax.f32 %v14, 0.0
  %v34 = vmax.f32 %v15, 0.0
  %v35 = vmax.f32 %v16, 0.0
  %v36 = vmax.f32 %v17, 0.0
  %v37 = vmax.f32 %v18, 0.0
  %v38 = vmax.f32 %v19, 0.0
  %v39 = vmax.f32 %v20, 0.0
  %v40 = vmax.f32 %v21, 0.0
  %v41 = vmax.f32 %v22, 0.0
  %v42 = vmax.f32 %v23, 0.0
  %v43 = vmax.f32 %v24, 0.0
  %v44 = vmax.f32 %v25, 0.0
  %v45 = vmax.f32 %v26, 0.0
  %v46 = vmax.f32 %v27, 0.0
  %v47 = vmax.f32 %v28, 0.0
  %v48 = vmax.f32 %v29, 0.0
  %v49 = vsel %vm32, %v33, %v14
  %v50 = vsel %vm32, %v34, %v15
  %v51 = vsel %vm32, %v35, %v16
  %v52 = vsel %vm32, %v36, %v17
  %v53 = vsel %vm32, %v37, %v18
  %v54 = vsel %vm32, %v38, %v19
  %v55 = vsel %vm32, %v39, %v20
  %v56 = vsel %vm32, %v40, %v21
  %v57 = vsel %vm32, %v41, %v22
  %v58 = vsel %vm32, %v42, %v23
  %v59 = vsel %vm32, %v43, %v24
  %v60 = vsel %vm32, %v44, %v25
  %v61 = vsel %vm32, %v45, %v26
  %v62 = vsel %vm32, %v46, %v27
  %v63 = vsel %vm32, %v47, %v28
  %v64 = vsel %vm32, %v48, %v29
  %v65 = vld [vmem:[%s1] sm:$0xff]
  %v66 = vld [vmem:[%s2] sm:$0x1]
  %v68 = vlaneseq
  %v69 = vshrl.u32 %v68, 7
  %v70 = vsub.s32 0, %v69
  %v71 = vrot.slane %v66, %v70
  %vm73 = vcmask 64512
  %v75 = vsel %vm73, %v49, 0
  %v78 = vsel %vm73, %v50, 0
  %v81 = vsel %vm73, %v51, 0
  %v84 = vsel %vm73, %v52, 0
  %v87 = vsel %vm73, %v53, 0
  %v90 = vsel %vm73, %v54, 0
  %v93 = vsel %vm73, %v55, 0
  %v96 = vsel %vm73, %v56, 0
  %v99 = vsel %vm73, %v57, 0
  %v102 = vsel %vm73, %v58, 0
  %v105 = vsel %vm73, %v59, 0
  %v108 = vsel %vm73, %v60, 0
  %v111 = vsel %vm73, %v61, 0
  %v114 = vsel %vm73, %v62, 0
  %v117 = vsel %vm73, %v63, 0
  %v120 = vsel %vm73, %v64, 0
  %122 = vmatprep.subr.mxu0 0.0
  %123 = vmatpush1.msra.mxu0 %v65
  %124 = vmatprep.subr.mxu0 0.0
  %125 = vmatpush1.msra.mxu0 0.0
  %126 = vmatprep.subr.mxu0 0.0
  %127 = vmatpush1.msra.mxu0 0.0
  %128 = vmatprep.subr.mxu0 0.0
  %129 = vmatpush1.msra.mxu0 0.0
  %130 = vmatprep.subr.mxu0 0.0
  %131 = vmatpush1.msra.mxu0 0.0
  %132 = vmatprep.subr.mxu0 0.0
  %133 = vmatpush1.msra.mxu0 0.0
  %134 = vmatprep.subr.mxu0 0.0
  %135 = vmatpush1.msra.mxu0 0.0
  %136 = vmatprep.subr.mxu0 0.0
  %137 = vmatpush1.msra.mxu0 0.0
  %138 = vmatprep.subr.mxu0 0.0
  %139 = vmatpush1.msra.mxu0 0.0
  %140 = vmatprep.subr.mxu0 0.0
  %141 = vmatpush1.msra.mxu0 0.0
  %142 = vmatprep.subr.mxu0 0.0
  %143 = vmatpush1.msra.mxu0 0.0
  %144 = vmatprep.subr.mxu0 0.0
  %145 = vmatpush1.msra.mxu0 0.0
  %146 = vmatprep.subr.mxu0 0.0
  %147 = vmatpush1.msra.mxu0 0.0
  %148 = vmatprep.subr.mxu0 0.0
  %149 = vmatpush1.msra.mxu0 0.0
  %150 = vmatprep.subr.mxu0 0.0
  %151 = vmatpush1.msra.mxu0 0.0
  %152 = vmatprep.subr.mxu0 0.0
  %153 = vmatpush1.msra.mxu0 0.0
  %154 = vmatprep.subr.mxu0 0.0
  %155 = vmatpush1.msra.mxu0 0.0
  %156 = vmatprep.subr.mxu0 0.0
  %157 = vmatpush1.msra.mxu0 0.0
  %158 = vmatprep.subr.mxu0 0.0
  %159 = vmatpush1.msra.mxu0 0.0
  %160 = vmatprep.subr.mxu0 0.0
  %161 = vmatpush1.msra.mxu0 0.0
  %162 = vmatprep.subr.mxu0 0.0
  %163 = vmatpush1.msra.mxu0 0.0
  %164 = vmatprep.subr.mxu0 0.0
  %165 = vmatpush1.msra.mxu0 0.0
  %166 = vmatprep.subr.mxu0 0.0
  %167 = vmatpush1.msra.mxu0 0.0
  %168 = vmatprep.subr.mxu0 0.0
  %169 = vmatpush1.msra.mxu0 0.0
  %170 = vmatprep.subr.mxu0 0.0
  %171 = vmatpush1.msra.mxu0 0.0
  %172 = vmatprep.subr.mxu0 0.0
  %173 = vmatpush1.msra.mxu0 0.0
  %174 = vmatprep.subr.mxu0 0.0
  %175 = vmatpush1.msra.mxu0 0.0
  %176 = vmatprep.subr.mxu0 0.0
  %177 = vmatpush1.msra.mxu0 0.0
  %178 = vmatprep.subr.mxu0 0.0
  %179 = vmatpush1.msra.mxu0 0.0
  %180 = vmatprep.subr.mxu0 0.0
  %181 = vmatpush1.msra.mxu0 0.0
  %182 = vmatprep.subr.mxu0 0.0
  %183 = vmatpush1.msra.mxu0 0.0
  %184 = vmatprep.subr.mxu0 0.0
  %185 = vmatpush1.msra.mxu0 0.0
  %186 = vmatprep.mubr.f32.mxu0 0.0
  %187 = vmatmul.mubr.f32.gmra.mrb[0].mxu0 %v75
  %v188 = vpop.f32.mrb[0].mxu0
  %v189 = vadd.f32 %v71, %v188
  %v190 = vpop.f32.mrb[0].mxu0
  %191 = vmatprep.mubr.f32.mxu0 0.0
  %192 = vmatmul.mubr.f32.gmra.mrb[0].mxu0 %v78
  %v193 = vpop.f32.mrb[0].mxu0
  %v194 = vadd.f32 %v71, %v193
  %v195 = vpop.f32.mrb[0].mxu0
  %196 = vmatprep.mubr.f32.mxu0 0.0
  %197 = vmatmul.mubr.f32.gmra.mrb[0].mxu0 %v81
  %v198 = vpop.f32.mrb[0].mxu0
  %v199 = vadd.f32 %v71, %v198
  %v200 = vpop.f32.mrb[0].mxu0
  %201 = vmatprep.mubr.f32.mxu0 0.0
  %202 = vmatmul.mubr.f32.gmra.mrb[0].mxu0 %v84
  %v203 = vpop.f32.mrb[0].mxu0
  %v204 = vadd.f32 %v71, %v203
  %v205 = vpop.f32.mrb[0].mxu0
  %206 = vmatprep.mubr.f32.mxu0 0.0
  %207 = vmatmul.mubr.f32.gmra.mrb[0].mxu0 %v87
  %v208 = vpop.f32.mrb[0].mxu0
  %v209 = vadd.f32 %v71, %v208
  %v210 = vpop.f32.mrb[0].mxu0
  %211 = vmatprep.mubr.f32.mxu0 0.0
  %212 = vmatmul.mubr.f32.gmra.mrb[0].mxu0 %v90
  %v213 = vpop.f32.mrb[0].mxu0
  %v214 = vadd.f32 %v71, %v213
  %v215 = vpop.f32.mrb[0].mxu0
  %216 = vmatprep.mubr.f32.mxu0 0.0
  %217 = vmatmul.mubr.f32.gmra.mrb[0].mxu0 %v93
  %v218 = vpop.f32.mrb[0].mxu0
  %v219 = vadd.f32 %v71, %v218
  %v220 = vpop.f32.mrb[0].mxu0
  %221 = vmatprep.mubr.f32.mxu0 0.0
  %222 = vmatmul.mubr.f32.gmra.mrb[0].mxu0 %v96
  %v223 = vpop.f32.mrb[0].mxu0
  %v224 = vadd.f32 %v71, %v223
  %v225 = vpop.f32.mrb[0].mxu0
  %226 = vmatprep.mubr.f32.mxu0 0.0
  %227 = vmatmul.mubr.f32.gmra.mrb[0].mxu0 %v99
  %v228 = vpop.f32.mrb[0].mxu0
  %v229 = vadd.f32 %v71, %v228
  %v230 = vpop.f32.mrb[0].mxu0
  %231 = vmatprep.mubr.f32.mxu0 0.0
  %232 = vmatmul.mubr.f32.gmra.mrb[0].mxu0 %v102
  %v233 = vpop.f32.mrb[0].mxu0
  %v234 = vadd.f32 %v71, %v233
  %v235 = vpop.f32.mrb[0].mxu0
  %236 = vmatprep.mubr.f32.mxu0 0.0
  %237 = vmatmul.mubr.f32.gmra.mrb[0].mxu0 %v105
  %v238 = vpop.f32.mrb[0].mxu0
  %v239 = vadd.f32 %v71, %v238
  %v240 = vpop.f32.mrb[0].mxu0
  %241 = vmatprep.mubr.f32.mxu0 0.0
  %242 = vmatmul.mubr.f32.gmra.mrb[0].mxu0 %v108
  %v243 = vpop.f32.mrb[0].mxu0
  %v244 = vadd.f32 %v71, %v243
  %v245 = vpop.f32.mrb[0].mxu0
  %246 = vmatprep.mubr.f32.mxu0 0.0
  %247 = vmatmul.mubr.f32.gmra.mrb[0].mxu0 %v111
  %v248 = vpop.f32.mrb[0].mxu0
  %v249 = vadd.f32 %v71, %v248
  %v250 = vpop.f32.mrb[0].mxu0
  %251 = vmatprep.mubr.f32.mxu0 0.0
  %252 = vmatmul.mubr.f32.gmra.mrb[0].mxu0 %v114
  %v253 = vpop.f32.mrb[0].mxu0
  %v254 = vadd.f32 %v71, %v253
  %v255 = vpop.f32.mrb[0].mxu0
  %256 = vmatprep.mubr.f32.mxu0 0.0
  %257 = vmatmul.mubr.f32.gmra.mrb[0].mxu0 %v117
  %v258 = vpop.f32.mrb[0].mxu0
  %v259 = vadd.f32 %v71, %v258
  %v260 = vpop.f32.mrb[0].mxu0
  %261 = vmatprep.mubr.f32.mxu0 0.0
  %262 = vmatmul.mubr.f32.gmra.mrb[0].mxu0 %v120
  %v263 = vpop.f32.mrb[0].mxu0
  %v264 = vadd.f32 %v71, %v263
  %v265 = vpop.f32.mrb[0].mxu0
  %266 = vdwg.mxu0
  %vm267 = vcmask 56320
  %268 = vst.msk [vmem:[%s3] sm:$0xff] %vm267, %v189
  %269 = vst.msk [vmem:[%s3 + $0x8] sm:$0xff] %vm267, %v194
  %270 = vst.msk [vmem:[%s3 + $0x10] sm:$0xff] %vm267, %v199
  %271 = vst.msk [vmem:[%s3 + $0x18] sm:$0xff] %vm267, %v204
  %272 = vst.msk [vmem:[%s3 + $0x20] sm:$0xff] %vm267, %v209
  %273 = vst.msk [vmem:[%s3 + $0x28] sm:$0xff] %vm267, %v214
  %274 = vst.msk [vmem:[%s3 + $0x30] sm:$0xff] %vm267, %v219
  %275 = vst.msk [vmem:[%s3 + $0x38] sm:$0xff] %vm267, %v224
  %276 = vst.msk [vmem:[%s3 + $0x40] sm:$0xff] %vm267, %v229
  %277 = vst.msk [vmem:[%s3 + $0x48] sm:$0xff] %vm267, %v234
  %278 = vst.msk [vmem:[%s3 + $0x50] sm:$0xff] %vm267, %v239
  %279 = vst.msk [vmem:[%s3 + $0x58] sm:$0xff] %vm267, %v244
  %280 = vst.msk [vmem:[%s3 + $0x60] sm:$0xff] %vm267, %v249
  %281 = vst.msk [vmem:[%s3 + $0x68] sm:$0xff] %vm267, %v254
  %282 = vst.msk [vmem:[%s3 + $0x70] sm:$0xff] %vm267, %v259
  %283 = vst.msk [vmem:[%s3 + $0x78] sm:$0xff] %vm267, %v264
  // Predicated region
  $region14: #{skip_connection_forward.3} parent=0 // pred_check
    _
  $region15: #{skip_connection_forward.3} parent=0 // pred_check_branch
    %285 = sbr.rel (0) target = $region17
  $region16: #{skip_connection_forward.3} parent=0 // pred_region
    _
  $region17: #{skip_connection_forward.3} parent=0 // pred_fallthru
    _
  // Predicated region
  $region18: #{skip_connection_forward.3} parent=0 // pred_check
    _
  $region19: #{skip_connection_forward.3} parent=0 // pred_check_branch
    %287 = sbr.rel (0) target = $region21
  $region20: #{skip_connection_forward.3} parent=0 // pred_region
    _
  $region21: #{skip_connection_forward.3} parent=0 // pred_fallthru
    _

// kernel: skip_connection_forward.2
$region0: #{skip_connection_forward.2}
  #allocation0 [shape = 'u32[]', space=smem, size = 0x4, offset = 0x4, fixed_abs, tag = 'smem constant byte address 0x4 - core index']
  #allocation1 [shape = 'u32[144,128]{1,0:T(1,128)}', space=vmem, size = 0x12000, scoped, tag = 'internal scratch']
  %s0 = inlined_call_operand.vmem [shape: f32[128,8], index: 0, kind: input, shape index: {}]
  %s1 = inlined_call_operand.vmem [shape: f32[8,7], index: 1, kind: input, shape index: {}]
  %s2 = inlined_call_operand.vmem [shape: f32[8,7], index: 2, kind: output, shape index: {0}]
  %s3 = inlined_call_operand.vmem [shape: f32[8,7], index: 3, kind: output, shape index: {1}]
  %4 = xla_tuple %s2, %s3
  %s5 = sld [smem:[#allocation0]]
  $region26: #{skip_connection_forward.2} parent=0
    _
  %s7 = ssub.s32 1, %s5
  %s8 = scalar_select 0, %s7, %s5
  // Predicated region
  $region2: #{skip_connection_forward.2} parent=0 // pred_check
    _
  $region3: #{skip_connection_forward.2} parent=0 // pred_check_branch
    %10 = sbr.rel (0) target = $region5
  $region4: #{skip_connection_forward.2} parent=0 // pred_region
    _
  $region5: #{skip_connection_forward.2} parent=0 // pred_fallthru
    _
  // Predicated region
  $region6: #{skip_connection_forward.2} parent=0 // pred_check
    _
  $region7: #{skip_connection_forward.2} parent=0 // pred_check_branch
    %12 = sbr.rel (0) target = $region9
  $region8: #{skip_connection_forward.2} parent=0 // pred_region
    _
  $region9: #{skip_connection_forward.2} parent=0 // pred_fallthru
    _
  %v13 = vld [vmem:[%s0] sm:$0xff]
  %v14 = vld [vmem:[%s0 + $0x8] sm:$0xff]
  %v15 = vld [vmem:[%s0 + $0x10] sm:$0xff]
  %v16 = vld [vmem:[%s0 + $0x18] sm:$0xff]
  %v17 = vld [vmem:[%s0 + $0x20] sm:$0xff]
  %v18 = vld [vmem:[%s0 + $0x28] sm:$0xff]
  %v19 = vld [vmem:[%s0 + $0x30] sm:$0xff]
  %v20 = vld [vmem:[%s0 + $0x38] sm:$0xff]
  %v21 = vld [vmem:[%s0 + $0x40] sm:$0xff]
  %v22 = vld [vmem:[%s0 + $0x48] sm:$0xff]
  %v23 = vld [vmem:[%s0 + $0x50] sm:$0xff]
  %v24 = vld [vmem:[%s0 + $0x58] sm:$0xff]
  %v25 = vld [vmem:[%s0 + $0x60] sm:$0xff]
  %v26 = vld [vmem:[%s0 + $0x68] sm:$0xff]
  %v27 = vld [vmem:[%s0 + $0x70] sm:$0xff]
  %v28 = vld [vmem:[%s0 + $0x78] sm:$0xff]
  %v29 = vlaneseq
  %v30 = vand.u32 %v29, 127
  %vm31 = vcmp.lt.s32.totalorder %v30, 4
  %v32 = vmax.f32 %v13, 0.0
  %v33 = vmax.f32 %v14, 0.0
  %v34 = vmax.f32 %v15, 0.0
  %v35 = vmax.f32 %v16, 0.0
  %v36 = vmax.f32 %v17, 0.0
  %v37 = vmax.f32 %v18, 0.0
  %v38 = vmax.f32 %v19, 0.0
  %v39 = vmax.f32 %v20, 0.0
  %v40 = vmax.f32 %v21, 0.0
  %v41 = vmax.f32 %v22, 0.0
  %v42 = vmax.f32 %v23, 0.0
  %v43 = vmax.f32 %v24, 0.0
  %v44 = vmax.f32 %v25, 0.0
  %v45 = vmax.f32 %v26, 0.0
  %v46 = vmax.f32 %v27, 0.0
  %v47 = vmax.f32 %v28, 0.0
  %v48 = vsel %vm31, %v32, %v13
  %v49 = vsel %vm31, %v33, %v14
  %v50 = vsel %vm31, %v34, %v15
  %v51 = vsel %vm31, %v35, %v16
  %v52 = vsel %vm31, %v36, %v17
  %v53 = vsel %vm31, %v37, %v18
  %v54 = vsel %vm31, %v38, %v19
  %v55 = vsel %vm31, %v39, %v20
  %v56 = vsel %vm31, %v40, %v21
  %v57 = vsel %vm31, %v41, %v22
  %v58 = vsel %vm31, %v42, %v23
  %v59 = vsel %vm31, %v43, %v24
  %v60 = vsel %vm31, %v44, %v25
  %v61 = vsel %vm31, %v45, %v26
  %v62 = vsel %vm31, %v46, %v27
  %v63 = vsel %vm31, %v47, %v28
  %v64 = vld [vmem:[%s1] sm:$0xff]
  %vm65 = vcmask 64512
  %v67 = vsel %vm65, %v48, 0
  %v70 = vsel %vm65, %v49, 0
  %v73 = vsel %vm65, %v50, 0
  %v76 = vsel %vm65, %v51, 0
  %v79 = vsel %vm65, %v52, 0
  %v82 = vsel %vm65, %v53, 0
  %v85 = vsel %vm65, %v54, 0
  %v88 = vsel %vm65, %v55, 0
  %v91 = vsel %vm65, %v56, 0
  %v94 = vsel %vm65, %v57, 0
  %v97 = vsel %vm65, %v58, 0
  %v100 = vsel %vm65, %v59, 0
  %v103 = vsel %vm65, %v60, 0
  %v106 = vsel %vm65, %v61, 0
  %v109 = vsel %vm65, %v62, 0
  %v112 = vsel %vm65, %v63, 0
  %114 = vmatprep.subr.mxu0 0.0
  %115 = vmatpush1.msra.mxu0 %v64
  %116 = vmatprep.subr.mxu0 0.0
  %117 = vmatpush1.msra.mxu0 0.0
  %118 = vmatprep.subr.mxu0 0.0
  %119 = vmatpush1.msra.mxu0 0.0
  %120 = vmatprep.subr.mxu0 0.0
  %121 = vmatpush1.msra.mxu0 0.0
  %122 = vmatprep.subr.mxu0 0.0
  %123 = vmatpush1.msra.mxu0 0.0
  %124 = vmatprep.subr.mxu0 0.0
  %125 = vmatpush1.msra.mxu0 0.0
  %126 = vmatprep.subr.mxu0 0.0
  %127 = vmatpush1.msra.mxu0 0.0
  %128 = vmatprep.subr.mxu0 0.0
  %129 = vmatpush1.msra.mxu0 0.0
  %130 = vmatprep.subr.mxu0 0.0
  %131 = vmatpush1.msra.mxu0 0.0
  %132 = vmatprep.subr.mxu0 0.0
  %133 = vmatpush1.msra.mxu0 0.0
  %134 = vmatprep.subr.mxu0 0.0
  %135 = vmatpush1.msra.mxu0 0.0
  %136 = vmatprep.subr.mxu0 0.0
  %137 = vmatpush1.msra.mxu0 0.0
  %138 = vmatprep.subr.mxu0 0.0
  %139 = vmatpush1.msra.mxu0 0.0
  %140 = vmatprep.subr.mxu0 0.0
  %141 = vmatpush1.msra.mxu0 0.0
  %142 = vmatprep.subr.mxu0 0.0
  %143 = vmatpush1.msra.mxu0 0.0
  %144 = vmatprep.subr.mxu0 0.0
  %145 = vmatpush1.msra.mxu0 0.0
  %146 = vmatprep.subr.mxu0 0.0
  %147 = vmatpush1.msra.mxu0 0.0
  %148 = vmatprep.subr.mxu0 0.0
  %149 = vmatpush1.msra.mxu0 0.0
  %150 = vmatprep.subr.mxu0 0.0
  %151 = vmatpush1.msra.mxu0 0.0
  %152 = vmatprep.subr.mxu0 0.0
  %153 = vmatpush1.msra.mxu0 0.0
  %154 = vmatprep.subr.mxu0 0.0
  %155 = vmatpush1.msra.mxu0 0.0
  %156 = vmatprep.subr.mxu0 0.0
  %157 = vmatpush1.msra.mxu0 0.0
  %158 = vmatprep.subr.mxu0 0.0
  %159 = vmatpush1.msra.mxu0 0.0
  %160 = vmatprep.subr.mxu0 0.0
  %161 = vmatpush1.msra.mxu0 0.0
  %162 = vmatprep.subr.mxu0 0.0
  %163 = vmatpush1.msra.mxu0 0.0
  %164 = vmatprep.subr.mxu0 0.0
  %165 = vmatpush1.msra.mxu0 0.0
  %166 = vmatprep.subr.mxu0 0.0
  %167 = vmatpush1.msra.mxu0 0.0
  %168 = vmatprep.subr.mxu0 0.0
  %169 = vmatpush1.msra.mxu0 0.0
  %170 = vmatprep.subr.mxu0 0.0
  %171 = vmatpush1.msra.mxu0 0.0
  %172 = vmatprep.subr.mxu0 0.0
  %173 = vmatpush1.msra.mxu0 0.0
  %174 = vmatprep.subr.mxu0 0.0
  %175 = vmatpush1.msra.mxu0 0.0
  %176 = vmatprep.subr.mxu0 0.0
  %177 = vmatpush1.msra.mxu0 0.0
  %178 = vmatprep.mubr.f32.mxu0 0.0
  %179 = vmatmul.mubr.f32.gmra.mrb[0].mxu0 %v67
  %v180 = vpop.f32.mrb[0].mxu0
  %v181 = vadd.f32 0.0, %v180
  %v182 = vpop.f32.mrb[0].mxu0
  %183 = vmatprep.mubr.f32.mxu0 0.0
  %184 = vmatmul.mubr.f32.gmra.mrb[0].mxu0 %v70
  %v185 = vpop.f32.mrb[0].mxu0
  %v186 = vadd.f32 0.0, %v185
  %v187 = vpop.f32.mrb[0].mxu0
  %188 = vmatprep.mubr.f32.mxu0 0.0
  %189 = vmatmul.mubr.f32.gmra.mrb[0].mxu0 %v73
  %v190 = vpop.f32.mrb[0].mxu0
  %v191 = vadd.f32 0.0, %v190
  %v192 = vpop.f32.mrb[0].mxu0
  %193 = vmatprep.mubr.f32.mxu0 0.0
  %194 = vmatmul.mubr.f32.gmra.mrb[0].mxu0 %v76
  %v195 = vpop.f32.mrb[0].mxu0
  %v196 = vadd.f32 0.0, %v195
  %v197 = vpop.f32.mrb[0].mxu0
  %198 = vmatprep.mubr.f32.mxu0 0.0
  %199 = vmatmul.mubr.f32.gmra.mrb[0].mxu0 %v79
  %v200 = vpop.f32.mrb[0].mxu0
  %v201 = vadd.f32 0.0, %v200
  %v202 = vpop.f32.mrb[0].mxu0
  %203 = vmatprep.mubr.f32.mxu0 0.0
  %204 = vmatmul.mubr.f32.gmra.mrb[0].mxu0 %v82
  %v205 = vpop.f32.mrb[0].mxu0
  %v206 = vadd.f32 0.0, %v205
  %v207 = vpop.f32.mrb[0].mxu0
  %208 = vmatprep.mubr.f32.mxu0 0.0
  %209 = vmatmul.mubr.f32.gmra.mrb[0].mxu0 %v85
  %v210 = vpop.f32.mrb[0].mxu0
  %v211 = vadd.f32 0.0, %v210
  %v212 = vpop.f32.mrb[0].mxu0
  %213 = vmatprep.mubr.f32.mxu0 0.0
  %214 = vmatmul.mubr.f32.gmra.mrb[0].mxu0 %v88
  %v215 = vpop.f32.mrb[0].mxu0
  %v216 = vadd.f32 0.0, %v215
  %v217 = vpop.f32.mrb[0].mxu0
  %218 = vmatprep.mubr.f32.mxu0 0.0
  %219 = vmatmul.mubr.f32.gmra.mrb[0].mxu0 %v91
  %v220 = vpop.f32.mrb[0].mxu0
  %v221 = vadd.f32 0.0, %v220
  %v222 = vpop.f32.mrb[0].mxu0
  %223 = vmatprep.mubr.f32.mxu0 0.0
  %224 = vmatmul.mubr.f32.gmra.mrb[0].mxu0 %v94
  %v225 = vpop.f32.mrb[0].mxu0
  %v226 = vadd.f32 0.0, %v225
  %v227 = vpop.f32.mrb[0].mxu0
  %228 = vmatprep.mubr.f32.mxu0 0.0
  %229 = vmatmul.mubr.f32.gmra.mrb[0].mxu0 %v97
  %v230 = vpop.f32.mrb[0].mxu0
  %v231 = vadd.f32 0.0, %v230
  %v232 = vpop.f32.mrb[0].mxu0
  %233 = vmatprep.mubr.f32.mxu0 0.0
  %234 = vmatmul.mubr.f32.gmra.mrb[0].mxu0 %v100
  %v235 = vpop.f32.mrb[0].mxu0
  %v236 = vadd.f32 0.0, %v235
  %v237 = vpop.f32.mrb[0].mxu0
  %238 = vmatprep.mubr.f32.mxu0 0.0
  %239 = vmatmul.mubr.f32.gmra.mrb[0].mxu0 %v103
  %v240 = vpop.f32.mrb[0].mxu0
  %v241 = vadd.f32 0.0, %v240
  %v242 = vpop.f32.mrb[0].mxu0
  %243 = vmatprep.mubr.f32.mxu0 0.0
  %244 = vmatmul.mubr.f32.gmra.mrb[0].mxu0 %v106
  %v245 = vpop.f32.mrb[0].mxu0
  %v246 = vadd.f32 0.0, %v245
  %v247 = vpop.f32.mrb[0].mxu0
  %248 = vmatprep.mubr.f32.mxu0 0.0
  %249 = vmatmul.mubr.f32.gmra.mrb[0].mxu0 %v109
  %v250 = vpop.f32.mrb[0].mxu0
  %v251 = vadd.f32 0.0, %v250
  %v252 = vpop.f32.mrb[0].mxu0
  %253 = vmatprep.mubr.f32.mxu0 0.0
  %254 = vmatmul.mubr.f32.gmra.mrb[0].mxu0 %v112
  %v255 = vpop.f32.mrb[0].mxu0
  %v256 = vadd.f32 0.0, %v255
  %v257 = vpop.f32.mrb[0].mxu0
  %258 = vdwg.mxu0
  %vm259 = vcmask 56320
  %v260 = vsel %vm259, %v181, 0.0
  %v261 = vsel %vm259, %v186, 0.0
  %v262 = vadd.f32 %v260, %v261
  %v263 = vsel %vm259, %v191, 0.0
  %v264 = vadd.f32 %v262, %v263
  %v265 = vsel %vm259, %v196, 0.0
  %v266 = vadd.f32 %v264, %v265
  %v267 = vsel %vm259, %v201, 0.0
  %v268 = vadd.f32 %v266, %v267
  %v269 = vsel %vm259, %v206, 0.0
  %v270 = vadd.f32 %v268, %v269
  %v271 = vsel %vm259, %v211, 0.0
  %v272 = vadd.f32 %v270, %v271
  %v273 = vsel %vm259, %v216, 0.0
  %v274 = vadd.f32 %v272, %v273
  %v275 = vsel %vm259, %v221, 0.0
  %v276 = vadd.f32 %v274, %v275
  %v277 = vsel %vm259, %v226, 0.0
  %v278 = vadd.f32 %v276, %v277
  %v279 = vsel %vm259, %v231, 0.0
  %v280 = vadd.f32 %v278, %v279
  %v281 = vsel %vm259, %v236, 0.0
  %v282 = vadd.f32 %v280, %v281
  %v283 = vsel %vm259, %v241, 0.0
  %v284 = vadd.f32 %v282, %v283
  %v285 = vsel %vm259, %v246, 0.0
  %v286 = vadd.f32 %v284, %v285
  %v287 = vsel %vm259, %v251, 0.0
  %v288 = vadd.f32 %v286, %v287
  %v289 = vsel %vm259, %v256, 0.0
  %v290 = vadd.f32 %v288, %v289
  %v291 = vrot.slane %v290, 4
  %v292 = vadd.f32 %v290, %v291
  %v293 = vrot.slane %v292, 2
  %v294 = vadd.f32 %v292, %v293
  %v295 = vrot.slane %v294, 1
  %v296 = vadd.f32 %v294, %v295
  %v297 = vmul.f32 %v181, %v181
  %v298 = vmul.f32 %v186, %v186
  %v299 = vmul.f32 %v191, %v191
  %v300 = vmul.f32 %v196, %v196
  %v301 = vmul.f32 %v201, %v201
  %v302 = vmul.f32 %v206, %v206
  %v303 = vmul.f32 %v211, %v211
  %v304 = vmul.f32 %v216, %v216
  %v305 = vmul.f32 %v221, %v221
  %v306 = vmul.f32 %v226, %v226
  %v307 = vmul.f32 %v231, %v231
  %v308 = vmul.f32 %v236, %v236
  %v309 = vmul.f32 %v241, %v241
  %v310 = vmul.f32 %v246, %v246
  %v311 = vmul.f32 %v251, %v251
  %v312 = vmul.f32 %v256, %v256
  %v313 = vsel %vm259, %v297, 0.0
  %v314 = vsel %vm259, %v298, 0.0
  %v315 = vadd.f32 %v313, %v314
  %v316 = vsel %vm259, %v299, 0.0
  %v317 = vadd.f32 %v315, %v316
  %v318 = vsel %vm259, %v300, 0.0
  %v319 = vadd.f32 %v317, %v318
  %v320 = vsel %vm259, %v301, 0.0
  %v321 = vadd.f32 %v319, %v320
  %v322 = vsel %vm259, %v302, 0.0
  %v323 = vadd.f32 %v321, %v322
  %v324 = vsel %vm259, %v303, 0.0
  %v325 = vadd.f32 %v323, %v324
  %v326 = vsel %vm259, %v304, 0.0
  %v327 = vadd.f32 %v325, %v326
  %v328 = vsel %vm259, %v305, 0.0
  %v329 = vadd.f32 %v327, %v328
  %v330 = vsel %vm259, %v306, 0.0
  %v331 = vadd.f32 %v329, %v330
  %v332 = vsel %vm259, %v307, 0.0
  %v333 = vadd.f32 %v331, %v332
  %v334 = vsel %vm259, %v308, 0.0
  %v335 = vadd.f32 %v333, %v334
  %v336 = vsel %vm259, %v309, 0.0
  %v337 = vadd.f32 %v335, %v336
  %v338 = vsel %vm259, %v310, 0.0
  %v339 = vadd.f32 %v337, %v338
  %v340 = vsel %vm259, %v311, 0.0
  %v341 = vadd.f32 %v339, %v340
  %v342 = vsel %vm259, %v312, 0.0
  %v343 = vadd.f32 %v341, %v342
  %v344 = vrot.slane %v343, 4
  %v345 = vadd.f32 %v343, %v344
  %v346 = vrot.slane %v345, 2
  %v347 = vadd.f32 %v345, %v346
  %v348 = vrot.slane %v347, 1
  %v349 = vadd.f32 %v347, %v348
  %350 = vst.msk [vmem:[%s2] sm:$0xff] %vm259, %v296
  %351 = vst.msk [vmem:[%s3] sm:$0xff] %vm259, %v349
  // Predicated region
  $region10: #{skip_connection_forward.2} parent=0 // pred_check
    _
  $region11: #{skip_connection_forward.2} parent=0 // pred_check_branch
    %353 = sbr.rel (0) target = $region13
  $region12: #{skip_connection_forward.2} parent=0 // pred_region
    _
  $region13: #{skip_connection_forward.2} parent=0 // pred_fallthru
    _
  // Predicated region
  $region14: #{skip_connection_forward.2} parent=0 // pred_check
    _
  $region15: #{skip_connection_forward.2} parent=0 // pred_check_branch
    %355 = sbr.rel (0) target = $region17
  $region16: #{skip_connection_forward.2} parent=0 // pred_region
    _
  $region17: #{skip_connection_forward.2} parent=0 // pred_fallthru
    _
  // Predicated region
  $region18: #{skip_connection_forward.2} parent=0 // pred_check
    _
  $region19: #{skip_connection_forward.2} parent=0 // pred_check_branch
    %357 = sbr.rel (0) target = $region21
  $region20: #{skip_connection_forward.2} parent=0 // pred_region
    _
  $region21: #{skip_connection_forward.2} parent=0 // pred_fallthru
    _
  // Predicated region
  $region22: #{skip_connection_forward.2} parent=0 // pred_check
    _
  $region23: #{skip_connection_forward.2} parent=0 // pred_check_branch
    %359 = sbr.rel (0) target = $region25
  $region24: #{skip_connection_forward.2} parent=0 // pred_region
    _
  $region25: #{skip_connection_forward.2} parent=0 // pred_fallthru
    _

</llo_original>
